<compile_context>
chip_gen: v5e
topology: v5e:2x2
jax: 0.10.0
libtpu: 0.0.40
codegen_flags: <defaults>
</compile_context>

<pallas_src>
import jax
import jax.numpy as jnp
from jax import lax
from jax.experimental import pallas as pl
from jax.experimental.pallas import tpu as pltpu

LANES = 128
# 4096 x 128 f32 = 2 MiB per input block; 2 inputs x 2 pipeline buffers = 8 MiB.
MAX_TILE_ROWS = 4096


def _round_up(x, m):
    return ((x + m - 1) // m) * m


def _make_bce_kernel(*, num_inner, num_tiles, tile_rows, fold, total,
                     needs_edge_mask, has_dup_block):
    rows_full = total // LANES       # number of fully valid rows
    rem_lanes = total % LANES        # valid lanes in the single partial row
    last_real = num_tiles - 1

    def kernel(flag_ref, truth_ref, out_ref):
        i = pl.program_id(0)
        j = pl.program_id(1)
        b = i * num_inner + j        # global (flattened) block index

        @pl.when(j == 0)
        def _():
            out_ref[...] = jnp.zeros_like(out_ref)

        p = flag_ref[...].astype(jnp.float32)
        t = truth_ref[...].astype(jnp.float32)

        # PyTorch BCELoss clamps each log term at -100; log1p(-p) matches
        # torch's formulation more closely than log(1 - p) for p near 0.
        log_p = jnp.maximum(jnp.log(p), -100.0)
        log_1mp = jnp.maximum(jnp.log1p(-p), -100.0)
        # Positive form: sign is folded into the wrapper epilogue; saves a
        # multiply + negate per element vs. -(t*log_p + (1-t)*log_1mp).
        pos = t * (log_p - log_1mp) + log_1mp

        def accumulate(vals):
            # Fold tile rows into the (fold, 128) resident accumulator:
            # tile_rows//fold independent VPU add chains, no XLU, no scalars.
            out_ref[...] += vals.reshape(-1, fold, LANES).sum(axis=0)

        if needs_edge_mask or has_dup_block:
            # Only the last real block can be ragged; a duplicate block
            # (b > last_real, index clamped in the index_map) contributes 0.
            @pl.when(b < last_real)
            def _():
                accumulate(pos)

            @pl.when(b == last_real)
            def _():
                row = lax.broadcasted_iota(jnp.int32, (tile_rows, LANES), 0)
                lane = lax.broadcasted_iota(jnp.int32, (tile_rows, LANES), 1)
                grow = row + b * tile_rows
                valid = (grow < rows_full) | ((grow == rows_full) &
                                              (lane < rem_lanes))
                # Select, NOT multiply: out-of-bounds rows may hold garbage
                # whose log is NaN/Inf; jnp.where is NaN-safe.
                accumulate(jnp.where(valid, pos, 0.0))
        else:
            accumulate(pos)

    return kernel


def flag_loss(flag, truth):
    """nn.BCELoss(flag, truth) with 'mean' reduction via a Pallas TPU kernel."""
    assert flag.shape == truth.shape
    total = flag.size

    # ---- lane-dense 2D view (free reshape when numel % 128 == 0) ----------
    flag_flat = flag.reshape(-1)
    truth_flat = truth.reshape(-1)
    lane_pad = _round_up(total, LANES) - total
    if lane_pad:
        # Only when numel isn't a multiple of 128.  Pad value (p=1, t=1) is
        # zero-loss and is additionally masked out in-kernel.
        flag_flat = jnp.pad(flag_flat, (0, lane_pad), constant_values=1)
        truth_flat = jnp.pad(truth_flat, (0, lane_pad), constant_values=1)
    rows = (total + lane_pad) // LANES
    # Native dtype in HBM (bf16 stays bf16); the f32 cast happens in-kernel.
    flag2d = flag_flat.reshape(rows, LANES)
    truth2d = truth_flat.reshape(rows, LANES)

    # ---- tiling ------------------------------------------------------------
    tile_rows = min(MAX_TILE_ROWS, _round_up(rows, 8))
    fold = 32 if tile_rows % 32 == 0 else 8
    num_tiles = pl.cdiv(rows, tile_rows)
    # Outer 'parallel' axis lets v7x shard partial sums across its 2 TCs;
    # degenerates to size 1 (free) on small inputs / single-TC chips.
    num_par = 2 if num_tiles >= 2 else 1
    num_inner = pl.cdiv(num_tiles, num_par)
    has_dup_block = num_par * num_inner != num_tiles          # odd tile count
    needs_edge_mask = num_tiles * tile_rows * LANES != total  # ragged tail

    if has_dup_block:
        last = num_tiles - 1
        # Clamp so the duplicate block never DMAs past the array; its
        # contribution is dropped in-kernel.
        in_map = lambda i, j: (jnp.minimum(i * num_inner + j, last), 0)
    else:
        in_map = lambda i, j: (i * num_inner + j, 0)

    kernel = _make_bce_kernel(
        num_inner=num_inner, num_tiles=num_tiles, tile_rows=tile_rows,
        fold=fold, total=total, needs_edge_mask=needs_edge_mask,
        has_dup_block=has_dup_block)

    partials = pl.pallas_call(
        kernel,
        out_shape=jax.ShapeDtypeStruct((num_par, fold, LANES), jnp.float32),
        grid_spec=pltpu.PrefetchScalarGridSpec(
            num_scalar_prefetch=0,
            grid=(num_par, num_inner),
            in_specs=[
                pl.BlockSpec((tile_rows, LANES), in_map),
                pl.BlockSpec((tile_rows, LANES), in_map),
            ],
            out_specs=pl.BlockSpec((None, fold, LANES), lambda i, j: (i, 0, 0)),
        ),
        compiler_params=pltpu.CompilerParams(
            dimension_semantics=("parallel", "arbitrary"),
        ),
    )(flag2d, truth2d)

    # Tiny epilogue: one cross-lane reduce; sign + divide by the TRUE numel.
    return jnp.sum(partials) / jnp.float32(-total)


def _reference_bce(flag, truth):
    p = flag.astype(jnp.float32)
    t = truth.astype(jnp.float32)
    log_p = jnp.maximum(jnp.log(p), -100.0)
    log_1mp = jnp.maximum(jnp.log1p(-p), -100.0)
    return jnp.mean(-(t * log_p + (1.0 - t) * log_1mp))


if __name__ == "__main__":
    key = jax.random.PRNGKey(0)
    k1, k2 = jax.random.split(key)

    # flag: predicted probabilities in (0, 1); truth: binary targets (NCHW).
    shape = (2, 4, 16, 16)
    flag = jax.nn.sigmoid(jax.random.normal(k1, shape, dtype=jnp.float32))
    truth = (jax.random.uniform(k2, shape) > 0.5).astype(jnp.float32)

    loss = flag_loss(flag, truth)
    loss = jax.block_until_ready(loss)

    ref = _reference_bce(flag, truth)
    assert jnp.allclose(loss, ref, rtol=1e-5, atol=1e-6), (loss, ref)

    print("KERNEL_OK")
</pallas_src>

<mosaic_0001>
module attributes {stable_mosaic.version = 11 : i64} {
  func.func @kernel(%arg0: i32, %arg1: i32, %arg2: memref<16x128xf32, #tpu.memory_space<vmem>>, %arg3: memref<16x128xf32, #tpu.memory_space<vmem>>, %arg4: memref<1x8x128xf32, #tpu.memory_space<vmem>>) attributes {dimension_semantics = [#tpu.dimension_semantics<parallel>, #tpu.dimension_semantics<arbitrary>], iteration_bounds = array<i64: 1, 1>, scalar_prefetch = 0 : i64, scratch_operands = 0 : i64, tpu.core_type = #tpu.core_type<tc>, window_params = [{transform_indices = @transform_0, window_bounds = array<i64: 16, 128>}, {transform_indices = @transform_1, window_bounds = array<i64: 16, 128>}, {transform_indices = @transform_2, window_bounds = array<i64: 1, 8, 128>}]} {
    %c0_i32 = arith.constant 0 : i32
    %0 = arith.cmpi eq, %arg1, %c0_i32 : i32
    %1 = arith.extui %0 : i1 to i32
    %c0_i32_0 = arith.constant 0 : i32
    %2 = arith.cmpi ne, %1, %c0_i32_0 : i32
    scf.if %2 {
      %cst_13 = arith.constant 0.000000e+00 : f32
      %24 = vector.broadcast %cst_13 : f32 to vector<8x128xf32>
      %c0_14 = arith.constant 0 : index
      %c0_15 = arith.constant 0 : index
      %c0_16 = arith.constant 0 : index
      %25 = vector.load %arg4[%c0_14, %c0_15, %c0_16] : memref<1x8x128xf32, #tpu.memory_space<vmem>>, vector<1x8x128xf32>
      %26 = vector.shape_cast %25 : vector<1x8x128xf32> to vector<8x128xf32>
      %27 = vector.shape_cast %24 : vector<8x128xf32> to vector<1x8x128xf32>
      tpu.vector_store %arg4[%c0_14, %c0_15, %c0_16], %27 {strides = array<i32>} : memref<1x8x128xf32, #tpu.memory_space<vmem>>, vector<1x8x128xf32>,
    } else {
    }
    %c0 = arith.constant 0 : index
    %c0_1 = arith.constant 0 : index
    %3 = vector.load %arg2[%c0, %c0_1] : memref<16x128xf32, #tpu.memory_space<vmem>>, vector<16x128xf32>
    %c0_2 = arith.constant 0 : index
    %c0_3 = arith.constant 0 : index
    %4 = vector.load %arg3[%c0_2, %c0_3] : memref<16x128xf32, #tpu.memory_space<vmem>>, vector<16x128xf32>
    %5 = math.log %3 : vector<16x128xf32>
    %cst = arith.constant -1.000000e+02 : f32
    %6 = vector.broadcast %cst : f32 to vector<16x128xf32>
    %7 = arith.maximumf %5, %6 : vector<16x128xf32>
    %cst_4 = arith.constant 0.000000e+00 : f32
    %8 = vector.broadcast %cst_4 : f32 to vector<16x128xf32>
    %9 = arith.subf %8, %3 : vector<16x128xf32>
    %10 = math.log1p %9 : vector<16x128xf32>
    %cst_5 = arith.constant -1.000000e+02 : f32
    %11 = vector.broadcast %cst_5 : f32 to vector<16x128xf32>
    %12 = arith.maximumf %10, %11 : vector<16x128xf32>
    %13 = arith.subf %7, %12 : vector<16x128xf32>
    %14 = arith.mulf %4, %13 : vector<16x128xf32>
    %15 = arith.addf %14, %12 : vector<16x128xf32>
    %c0_6 = arith.constant 0 : index
    %c0_7 = arith.constant 0 : index
    %c0_8 = arith.constant 0 : index
    %16 = vector.load %arg4[%c0_6, %c0_7, %c0_8] : memref<1x8x128xf32, #tpu.memory_space<vmem>>, vector<1x8x128xf32>
    %17 = vector.shape_cast %16 : vector<1x8x128xf32> to vector<8x128xf32>
    %18 = vector.shape_cast %15 : vector<16x128xf32> to vector<2x8x128xf32>
    %cst_9 = arith.constant dense<0.000000e+00> : vector<8x128xf32>
    %19 = vector.multi_reduction <add>, %18, %cst_9 [0] : vector<2x8x128xf32> to vector<8x128xf32>
    %20 = arith.addf %17, %19 : vector<8x128xf32>
    %c0_10 = arith.constant 0 : index
    %c0_11 = arith.constant 0 : index
    %c0_12 = arith.constant 0 : index
    %21 = vector.load %arg4[%c0_10, %c0_11, %c0_12] : memref<1x8x128xf32, #tpu.memory_space<vmem>>, vector<1x8x128xf32>
    %22 = vector.shape_cast %21 : vector<1x8x128xf32> to vector<8x128xf32>
    %23 = vector.shape_cast %20 : vector<8x128xf32> to vector<1x8x128xf32>
    tpu.vector_store %arg4[%c0_10, %c0_11, %c0_12], %23 {strides = array<i32>} : memref<1x8x128xf32, #tpu.memory_space<vmem>>, vector<1x8x128xf32>,
    return
  }
  func.func @transform_0(%arg0: i32, %arg1: i32) -> (i32, i32) {
    %c1_i32 = arith.constant 1 : i32
    %0 = arith.muli %arg0, %c1_i32 : i32
    %1 = arith.addi %0, %arg1 : i32
    %c0_i32 = arith.constant 0 : i32
    %c0_i32_0 = arith.constant 0 : i32
    return %1, %c0_i32 : i32, i32
  }
  func.func @transform_1(%arg0: i32, %arg1: i32) -> (i32, i32) {
    %c1_i32 = arith.constant 1 : i32
    %0 = arith.muli %arg0, %c1_i32 : i32
    %1 = arith.addi %0, %arg1 : i32
    %c0_i32 = arith.constant 0 : i32
    %c0_i32_0 = arith.constant 0 : i32
    return %1, %c0_i32 : i32, i32
  }
  func.func @transform_2(%arg0: i32, %arg1: i32) -> (i32, i32, i32) {
    %c0_i32 = arith.constant 0 : i32
    %c0_i32_0 = arith.constant 0 : i32
    %c0_i32_1 = arith.constant 0 : i32
    return %arg0, %c0_i32, %c0_i32_0 : i32, i32, i32
  }
}

</mosaic_0001>

<llo_original>
// kernel: tpu_custom_call.1
$region0: #{tpu_custom_call.1}
  #allocation0 [shape = 'u32[]', space=smem, size = 0x4, offset = 0x4, fixed_abs, tag = 'smem constant byte address 0x4 - core index']
  #allocation1 [shape = 'u32[72,128]{1,0:T(1,128)}', space=vmem, size = 0x9000, scoped, tag = 'internal scratch']
  %s0 = inlined_call_operand.hbm [shape: f32[16,128], index: 0, kind: input, shape index: {}]
  %s1 = inlined_call_operand.hbm [shape: f32[16,128], index: 1, kind: input, shape index: {}]
  %s2 = inlined_call_operand.hbm [shape: f32[1,8,128], index: 2, kind: output, shape index: {}]
  %s3 = sld [smem:[#allocation0]]
  $region30: #{tpu_custom_call.1} parent=0
    _
  %s5 = ssub.s32 1, %s3
  %s6 = scalar_select 0, %s5, %s3
  $region1: #{tpu_custom_call.1} parent=0
    #allocation2 [shape = 'u8[8192]{0}', space=vmem, size = 0x2000, scoped, tag = 'input window, operand 0, single buffered']
    #allocation3 [shape = 's32[1]{0}', space=sflag, size = 0x4, scoped, tag = 'scoped memory for tpu_custom_call.1']
    #allocation4 [shape = 's32[1]{0}', space=sflag, size = 0x4, scoped, tag = 'scoped memory for tpu_custom_call.1']
    #allocation5 [shape = 'u8[8192]{0}', space=vmem, size = 0x2000, scoped, tag = 'input window, operand 1, single buffered']
    #allocation6 [shape = 's32[1]{0}', space=sflag, size = 0x4, scoped, tag = 'scoped memory for tpu_custom_call.1']
    #allocation7 [shape = 'u8[4096]{0}', space=vmem, size = 0x1000, scoped, tag = 'output window, operand 0, single buffered']
    %7 = vsyncpa [#allocation3], 0
    %8 = vsyncpa [#allocation6], 0
    %9 = vsyncpa [#allocation4], 0
    // Predicated region
    $region2: #{tpu_custom_call.1} parent=1 // pred_check
      _
    $region3: #{tpu_custom_call.1} parent=1 // pred_check_branch
      %11 = sbr.rel (0) target = $region5
    $region4: #{tpu_custom_call.1} parent=1 // pred_region
      %s12 = sadd.s32 0, 0
      %s13 = smul.u32 2, %s12
      %15 = vsyncadd [#allocation3], 0
      %s16 = smul.addr %s13, 8
      %s17 = scalar_lea.hbm %s0, %s16
      %s18 = sshll.u32 %s17, 4
      %s19 = int_to_ptr.hbm [resolvable:$true] %s18
      %s20 = sshll.u32 [#allocation2], 4
      %s21 = int_to_ptr.vmem [resolvable:$true] %s20
      %26 = dma.hbm_to_vmem [thread:$0]  %s19, 256, %s21, [#allocation3], 128, 128, 8
    $region5: #{tpu_custom_call.1} parent=1 // pred_fallthru
      _
    // Predicated region
    $region6: #{tpu_custom_call.1} parent=1 // pred_check
      _
    $region7: #{tpu_custom_call.1} parent=1 // pred_check_branch
      %28 = sbr.rel (0) target = $region9
    $region8: #{tpu_custom_call.1} parent=1 // pred_region
      %s29 = sadd.s32 0, 0
      %s30 = smul.u32 2, %s29
      %32 = vsyncadd [#allocation6], 0
      %s33 = smul.addr %s30, 8
      %s34 = scalar_lea.hbm %s1, %s33
      %s35 = sshll.u32 %s34, 4
      %s36 = int_to_ptr.hbm [resolvable:$true] %s35
      %s37 = sshll.u32 [#allocation5], 4
      %s38 = int_to_ptr.vmem [resolvable:$true] %s37
      %43 = dma.hbm_to_vmem [thread:$0]  %s36, 256, %s38, [#allocation6], 128, 128, 8
    $region9: #{tpu_custom_call.1} parent=1 // pred_fallthru
      _
    // Predicated region
    $region10: #{tpu_custom_call.1} parent=1 // pred_check
      _
    $region11: #{tpu_custom_call.1} parent=1 // pred_check_branch
      %45 = sbr.rel (0) target = $region13
    $region12: #{tpu_custom_call.1} parent=1 // pred_region
      %47 = dma.done [#allocation3], 256
    $region13: #{tpu_custom_call.1} parent=1 // pred_fallthru
      _
    // Predicated region
    $region14: #{tpu_custom_call.1} parent=1 // pred_check
      _
    $region15: #{tpu_custom_call.1} parent=1 // pred_check_branch
      %49 = sbr.rel (0) target = $region17
    $region16: #{tpu_custom_call.1} parent=1 // pred_region
      %51 = dma.done [#allocation6], 256
    $region17: #{tpu_custom_call.1} parent=1 // pred_fallthru
      _
    %s52 = sadd.s32 0, 0
    %s53 = smul.u32 2, %s52
    %s54 = sadd.s32 0, 0
    %s55 = smul.u32 2, %s54
    %p56 = scmp.eq.s32.totalorder 0, 0
    // Predicated region
    $region18: #{tpu_custom_call.1} parent=1 // pred_check
      %p57 = pneg %p56
    $region19: #{tpu_custom_call.1} parent=1 // pred_check_branch
      %59 = sbr.rel (%p57) target = $region21
    $region20: #{tpu_custom_call.1} parent=1 // pred_region
      %60 = vst [vmem:[#allocation7] sm:$0xff] 0.0
    $region21: #{tpu_custom_call.1} parent=1 // pred_fallthru
      _
    %v61 = vld [vmem:[#allocation2] sm:$0xff]
    %v62 = vld [vmem:[#allocation2 + $0x8] sm:$0xff]
    %v63 = vld [vmem:[#allocation5] sm:$0xff]
    %v64 = vld [vmem:[#allocation5 + $0x8] sm:$0xff]
    %v65 = vlog2.pop %v61
    %v66 = vmul.f32 %v65, 0.6931472
    %v67 = vlog2.pop %v62
    %v68 = vmul.f32 %v67, 0.6931472
    %v69 = vmax.f32 %v66, -100.0
    %v70 = vmax.f32 %v68, -100.0
    %v71 = vsub.f32 0.0, %v61
    %v72 = vsub.f32 0.0, %v62
    %v73 = vadd.f32 %v71, 1.0
    %v74 = vlog2.pop %v73
    %v75 = vmul.f32 %v74, 0.6931472
    %v76 = vmul.f32 -0.5, %v71
    %v77 = vadd.f32 %v76, 1.0
    %v78 = vmul.f32 %v77, %v71
    %v79 = vand.u32 2147483647, %v71
    %vm80 = vcmp.lt.f32.partialorder %v79, 0.0004427343
    %v81 = vsel %vm80, %v78, %v75
    %v82 = vadd.f32 %v72, 1.0
    %v83 = vlog2.pop %v82
    %v84 = vmul.f32 %v83, 0.6931472
    %v85 = vmul.f32 -0.5, %v72
    %v86 = vadd.f32 %v85, 1.0
    %v87 = vmul.f32 %v86, %v72
    %v88 = vand.u32 2147483647, %v72
    %vm89 = vcmp.lt.f32.partialorder %v88, 0.0004427343
    %v90 = vsel %vm89, %v87, %v84
    %v91 = vmax.f32 %v81, -100.0
    %v92 = vmax.f32 %v90, -100.0
    %v93 = vsub.f32 %v69, %v91
    %v94 = vsub.f32 %v70, %v92
    %v95 = vmul.f32 %v63, %v93
    %v96 = vmul.f32 %v64, %v94
    %v97 = vadd.f32 %v95, %v91
    %v98 = vadd.f32 %v96, %v92
    %v99 = vld [vmem:[#allocation7] sm:$0xff]
    %v100 = vadd.f32 %v97, %v98
    %v101 = vadd.f32 %v99, %v100
    %102 = vst [vmem:[#allocation7] sm:$0xff] %v101
    // Predicated region
    $region22: #{tpu_custom_call.1} parent=1 // pred_check
      _
    $region23: #{tpu_custom_call.1} parent=1 // pred_check_branch
      %104 = sbr.rel (0) target = $region25
    $region24: #{tpu_custom_call.1} parent=1 // pred_region
      %106 = vsyncadd [#allocation4], 0
      %s108 = sshll.u32 [#allocation7], 4
      %s109 = int_to_ptr.vmem [resolvable:$true] %s108
      %s110 = sshll.u32 %s2, 4
      %s111 = int_to_ptr.hbm [resolvable:$true] %s110
      %113 = dma.vmem_to_hbm [thread:$0]  %s109, 128, %s111, [#allocation4]
    $region25: #{tpu_custom_call.1} parent=1 // pred_fallthru
      _
    // Predicated region
    $region26: #{tpu_custom_call.1} parent=1 // pred_check
      _
    $region27: #{tpu_custom_call.1} parent=1 // pred_check_branch
      %115 = sbr.rel (0) target = $region29
    $region28: #{tpu_custom_call.1} parent=1 // pred_region
      %117 = dma.done [#allocation4], 128
    $region29: #{tpu_custom_call.1} parent=1 // pred_fallthru
      _
    %118 = vsyncpa [#allocation3], 1
    %119 = vsyncpa [#allocation6], 1
    %120 = vsyncpa [#allocation4], 1

</llo_original>
